<compile_context>
chip_gen: v6e
topology: v6e:2x2x1
jax: 0.10.0
libtpu: 0.0.40
codegen_flags: <defaults>
</compile_context>

<pallas_src>
import jax
import jax.numpy as jnp
import numpy as np
from jax.experimental import pallas as pl
from jax.experimental.pallas import tpu as pltpu


# ----------------------------- kernels --------------------------------------

def _matvec_kernel(x_ref, w_ref, y_ref):
    # x_ref: (n_sample, input_dim) f32; w_ref: (1, input_dim) lane-major row.
    # VPU broadcast-multiply + lane reduction; avoids a padded MXU matmul.
    y_ref[...] = jnp.sum(x_ref[...] * w_ref[...], axis=-1, keepdims=True)


def _matmul_kernel(x_ref, w_ref, y_ref):
    # General out_dim: single-block MXU matmul with f32 accumulation.
    y_ref[...] = jnp.dot(x_ref[...], w_ref[...],
                         preferred_element_type=jnp.float32)


def _batched_matvec_kernel(x_ref, w_ref, y_ref):
    # x_ref: (1, n_sample, input_dim); w_ref: (1, input_dim); y_ref: (1, n_sample, 1).
    y_ref[0] = jnp.sum(x_ref[0] * w_ref[...], axis=-1, keepdims=True)


def _batched_matmul_kernel(x_ref, w_ref, y_ref):
    y_ref[0] = jnp.dot(x_ref[0], w_ref[...],
                       preferred_element_type=jnp.float32)


# ----------------------------- module ---------------------------------------

class MamlPallas:
    """JAX/Pallas port of MAML/test.py::maml (forward pass only)."""

    # get_sampleDataPoints hard-codes 10 labels regardless of n_sample.
    _N_LABEL = 10

    def __init__(self, input_dim, out_dim, n_sample):
        self.input_dim = input_dim
        self.out_dim = out_dim
        self.n_sample = n_sample

        # nn.Parameter(torch.zeros([input_dim, out_dim])) — deterministic zeros.
        self.weight = jnp.zeros((input_dim, out_dim), dtype=jnp.float32)

        # Weight layout prep hoisted out of forward: the matvec kernel wants
        # the weight as a lane-major (1, input_dim) row.
        if out_dim == 1:
            self._w_staged = self.weight.reshape(1, input_dim)
            kernel = _matvec_kernel
        else:
            self._w_staged = self.weight
            kernel = _matmul_kernel

        # Single-task pallas_call: no grid, full-array blocks (exempt from the
        # (8,128) divisibility rule at this size), everything in VMEM.
        self._single_call = pl.pallas_call(
            kernel,
            out_shape=jax.ShapeDtypeStruct((n_sample, out_dim), jnp.float32),
            in_specs=[
                pl.BlockSpec(memory_space=pltpu.MemorySpace.VMEM),  # X
                pl.BlockSpec(memory_space=pltpu.MemorySpace.VMEM),  # W
            ],
            out_specs=pl.BlockSpec(memory_space=pltpu.MemorySpace.VMEM),
        )

        # Jit the WHOLE forward (RNG + pallas_call + reshape): one dispatch.
        self._forward = jax.jit(self._forward_impl)
        self._forward_batched = jax.jit(self._forward_batched_impl,
                                        static_argnums=(2,))

    # -- single task (matches maml.forward()) ---------------------------------

    def _forward_impl(self, key, w_staged):
        kx, kl = jax.random.split(key)
        # torch.rand(n_sample, 30) -> U[0,1) features.
        x = jax.random.uniform(kx, (self.n_sample, self.input_dim),
                               dtype=jnp.float32)
        # np.random.choice([0,1], size=10, p=[.5,.5]).reshape(-1,1) -> Bernoulli.
        y_train = jax.random.bernoulli(
            kl, 0.5, (self._N_LABEL, 1)).astype(jnp.float32)

        y_pred = self._single_call(x, w_staged)
        # torch does .reshape(-1, 1); a no-op for out_dim == 1.
        return y_train, y_pred.reshape(-1, 1)

    def forward(self, key):
        return self._forward(key, self._w_staged)

    # -- batched tasks: one pallas_call, grid over T ---------------------------

    def _build_batched_call(self, T):
        if self.out_dim == 1:
            kernel = _batched_matvec_kernel
            w_spec = pl.BlockSpec((1, self.input_dim), lambda t: (0, 0))
        else:
            kernel = _batched_matmul_kernel
            w_spec = pl.BlockSpec((self.input_dim, self.out_dim),
                                  lambda t: (0, 0))

        compiler_params = None
        if jax.default_backend() == "tpu":
            # v7x has 2 TensorCores/chip: a "parallel" task axis shards tasks
            # across both; harmless on v5e/v6e (single TC).
            compiler_params = pltpu.CompilerParams(
                dimension_semantics=("parallel",))

        return pl.pallas_call(
            kernel,
            out_shape=jax.ShapeDtypeStruct(
                (T, self.n_sample, self.out_dim), jnp.float32),
            grid=(T,),
            in_specs=[
                pl.BlockSpec((1, self.n_sample, self.input_dim),
                             lambda t: (t, 0, 0)),
                w_spec,
            ],
            out_specs=pl.BlockSpec((1, self.n_sample, self.out_dim),
                                   lambda t: (t, 0, 0)),
            compiler_params=compiler_params,
        )

    def _forward_batched_impl(self, key, w_staged, T):
        kx, kl = jax.random.split(key)
        x = jax.random.uniform(kx, (T, self.n_sample, self.input_dim),
                               dtype=jnp.float32)
        y_train = jax.random.bernoulli(
            kl, 0.5, (T, self._N_LABEL, 1)).astype(jnp.float32)

        y_pred = self._build_batched_call(T)(x, w_staged)
        return y_train, y_pred.reshape(T, -1, 1)

    def forward_batched(self, key, T):
        """Run T independent MAML-task forwards in a single pallas_call."""
        return self._forward_batched(key, self._w_staged, T)


# ----------------------------- demo / check ----------------------------------

if __name__ == "__main__":
    # Shapes implied by the module: input_dim=30, out_dim=1, n_sample=10.
    model = MamlPallas(input_dim=30, out_dim=1, n_sample=10)

    key = jax.random.PRNGKey(0)

    # Single-task forward (matches maml.forward()).
    y_train, y_predict = model.forward(key)
    jax.block_until_ready((y_train, y_predict))

    assert y_train.shape == (10, 1)
    assert y_predict.shape == (10, 1)
    # Weight is zeros, so predictions must be exactly zero.
    np.testing.assert_allclose(np.asarray(y_predict), np.zeros((10, 1)), atol=0)
    yt = np.asarray(y_train)
    assert np.all((yt == 0.0) | (yt == 1.0))

    # Batched forward: 4 tasks in one kernel launch (grid over tasks).
    T = 4
    yb_train, yb_predict = model.forward_batched(key, T)
    jax.block_until_ready((yb_train, yb_predict))

    assert yb_train.shape == (T, 10, 1)
    assert yb_predict.shape == (T, 10, 1)
    np.testing.assert_allclose(np.asarray(yb_predict),
                               np.zeros((T, 10, 1)), atol=0)
    ybt = np.asarray(yb_train)
    assert np.all((ybt == 0.0) | (ybt == 1.0))

    print("KERNEL_OK")
</pallas_src>

<mosaic_0001>
module attributes {stable_mosaic.version = 11 : i64} {
  func.func @_matvec_kernel(%arg0: memref<10x30xf32, #tpu.memory_space<vmem>>, %arg1: memref<1x30xf32, #tpu.memory_space<vmem>>, %arg2: memref<10x1xf32, #tpu.memory_space<vmem>>) attributes {dimension_semantics = [], scalar_prefetch = 0 : i64, scratch_operands = 0 : i64, tpu.core_type = #tpu.core_type<tc>} {
    %c0 = arith.constant 0 : index
    %c0_0 = arith.constant 0 : index
    %0 = vector.load %arg0[%c0, %c0_0] : memref<10x30xf32, #tpu.memory_space<vmem>>, vector<10x30xf32>
    %c0_1 = arith.constant 0 : index
    %c0_2 = arith.constant 0 : index
    %1 = vector.load %arg1[%c0_1, %c0_2] : memref<1x30xf32, #tpu.memory_space<vmem>>, vector<1x30xf32>
    %2 = vector.broadcast %1 : vector<1x30xf32> to vector<10x30xf32>
    %3 = arith.mulf %0, %2 : vector<10x30xf32>
    %cst = arith.constant dense<0.000000e+00> : vector<10xf32>
    %4 = vector.multi_reduction <add>, %3, %cst [1] : vector<10x30xf32> to vector<10xf32>
    %5 = vector.shape_cast %4 : vector<10xf32> to vector<10x1xf32>
    %c0_3 = arith.constant 0 : index
    %c0_4 = arith.constant 0 : index
    %6 = vector.load %arg2[%c0_3, %c0_4] : memref<10x1xf32, #tpu.memory_space<vmem>>, vector<10x1xf32>
    tpu.vector_store %arg2[%c0_3, %c0_4], %5 {strides = array<i32>} : memref<10x1xf32, #tpu.memory_space<vmem>>, vector<10x1xf32>,
    return
  }
}

</mosaic_0001>

<llo_original>
// kernel: _forward_impl.1
$region0: #{_forward_impl.1}
  #allocation0 [shape = 'u32[]', space=smem, size = 0x4, offset = 0x4, fixed_abs, tag = 'smem constant byte address 0x4 - core index']
  #allocation1 [shape = 'u32[144,128]{1,0:T(1,128)}', space=vmem, size = 0x12000, scoped, tag = 'internal scratch']
  %s0 = inlined_call_operand.vmem [shape: f32[10,30], index: 0, kind: input, shape index: {}]
  %s1 = inlined_call_operand.vmem [shape: f32[1,30], index: 1, kind: input, shape index: {}]
  %s2 = inlined_call_operand.vmem [shape: f32[10,1], index: 2, kind: output, shape index: {}]
  %s3 = sld [smem:[#allocation0]]
  $region18: #{_forward_impl.1} parent=0
    _
  %s5 = ssub.s32 1, %s3
  %s6 = scalar_select 0, %s5, %s3
  // Predicated region
  $region2: #{_forward_impl.1} parent=0 // pred_check
    _
  $region3: #{_forward_impl.1} parent=0 // pred_check_branch
    %8 = sbr.rel (0) target = $region5
  $region4: #{_forward_impl.1} parent=0 // pred_region
    _
  $region5: #{_forward_impl.1} parent=0 // pred_fallthru
    _
  // Predicated region
  $region6: #{_forward_impl.1} parent=0 // pred_check
    _
  $region7: #{_forward_impl.1} parent=0 // pred_check_branch
    %10 = sbr.rel (0) target = $region9
  $region8: #{_forward_impl.1} parent=0 // pred_region
    _
  $region9: #{_forward_impl.1} parent=0 // pred_fallthru
    _
  %v11 = vld [vmem:[%s0] sm:$0xff]
  %v12 = vld [vmem:[%s0 + $0x8] sm:$0x3]
  %v13 = vld [vmem:[%s1] sm:$0x1]
  %v15 = vlaneseq
  %v16 = vshrl.u32 %v15, 7
  %v17 = vsub.s32 0, %v16
  %v18 = vrot.slane %v13, %v17
  %v20 = vmul.f32 %v11, %v18
  %v21 = vmul.f32 %v12, %v18
  %vm22 = vcmask 244736
  %v23 = vsel %vm22, %v20, 0.0
  %24 = vadd.xlane.f32.xlu0 %v23
  %v25 = vpop.xlane.xlu0 %24
  %vm26 = vcmask 238592
  %v27 = vsel %vm26, %v21, 0.0
  %28 = vadd.xlane.f32.xlu0 %v27
  %v29 = vpop.xlane.xlu0 %28
  %vm30 = vcmask 7168
  %31 = vst.msk [vmem:[%s2] sm:$0xff] %vm30, %v25
  %vm32 = vcmask 1024
  %33 = vst.msk [vmem:[%s2 + $0x8] sm:$0x3] %vm32, %v29
  // Predicated region
  $region10: #{_forward_impl.1} parent=0 // pred_check
    _
  $region11: #{_forward_impl.1} parent=0 // pred_check_branch
    %35 = sbr.rel (0) target = $region13
  $region12: #{_forward_impl.1} parent=0 // pred_region
    _
  $region13: #{_forward_impl.1} parent=0 // pred_fallthru
    _
  // Predicated region
  $region14: #{_forward_impl.1} parent=0 // pred_check
    _
  $region15: #{_forward_impl.1} parent=0 // pred_check_branch
    %37 = sbr.rel (0) target = $region17
  $region16: #{_forward_impl.1} parent=0 // pred_region
    _
  $region17: #{_forward_impl.1} parent=0 // pred_fallthru
    _

</llo_original>
